<compile_context>
chip_gen: v6e
topology: v6e:2x2x1
jax: 0.10.0
libtpu: 0.0.40
codegen_flags: <defaults>
</compile_context>

<pallas_src>
import functools

import jax
import jax.numpy as jnp
from jax import lax
from jax.experimental import pallas as pl
from jax.experimental.pallas import tpu as pltpu

# ---- small, self-consistent hyperparameters (module implies T == block_size) ----
BLOCK_SIZE = 8      # sequence length T
N_EMBD = 32         # C
NUM_HEADS = 4       # H
HEAD_SIZE = N_EMBD // NUM_HEADS   # D = 8
BATCH = 2


# ----------------------------- Pallas kernel -----------------------------------

def _mha_fused_kernel(x_ref, wqkv_ref, wproj_ref, bproj_ref, bias_ref, o_ref, *,
                      num_heads, head_size):
    """Whole batch in one step: QKV proj + causal attention + output proj.

    x_ref     : (B*T, C)       batch rows stacked
    wqkv_ref  : (C, 3*H*D)     per-head interleaved columns [Qh | Kh | Vh], Q pre-scaled
    wproj_ref : (C, C)         x @ W layout
    bproj_ref : (1, C)
    bias_ref  : (B*H*T, B*H*T) additive mask: 0 where (same batch & head, causal), -1e30 else
    o_ref     : (B*T, C)
    """
    H, D = num_heads, head_size
    R = x_ref.shape[0]            # B*T rows
    C_out = wproj_ref.shape[1]

    x = x_ref[...].astype(jnp.float32)                         # (R, C)
    wqkv = wqkv_ref[...].astype(jnp.float32)                   # (C, 3*H*D)

    # One MXU matmul produces Q, K, V for every (batch, head) at once.
    qkv = jnp.dot(x, wqkv, preferred_element_type=jnp.float32)  # (R, 3*H*D)

    # Stack heads along sublanes: rows ordered (head, batch, t).
    # Per-head columns are contiguous ([Qh|Kh|Vh], width 3*D) -> 4 wide slices.
    qkv_st = jnp.concatenate(
        [qkv[:, h * 3 * D:(h + 1) * 3 * D] for h in range(H)], axis=0)  # (H*R, 3D)
    q_st = qkv_st[:, 0:D]                                       # (H*R, D), scale pre-folded
    k_st = qkv_st[:, D:2 * D]
    v_st = qkv_st[:, 2 * D:3 * D]

    # Single score matmul for all (batch, head) pairs; contract on D (no k.T).
    s = lax.dot_general(q_st, k_st, (((1,), (1,)), ((), ())),
                        preferred_element_type=jnp.float32)     # (H*R, H*R)
    s = s + bias_ref[...]                                       # block-diag + causal bias

    # Softmax in f32 with deferred normalization (scale after the P@V matmul).
    s = s - jnp.max(s, axis=-1, keepdims=True)
    p = jnp.exp(s)
    o_st = jnp.dot(p, v_st, preferred_element_type=jnp.float32)            # (H*R, D)
    o_st = o_st * pl.reciprocal(jnp.sum(p, axis=-1, keepdims=True))
    # (exact reciprocal keeps the 1e-5 parity check; use approx=True at real size)

    # Head-concat + projection fused algebraically:
    #   cat(heads) @ Wp == sum_h head_h @ Wp[h*D:(h+1)*D, :]
    acc = jnp.zeros((R, C_out), jnp.float32)
    for h in range(H):                         # static unroll, H = 4
        oh = o_st[h * R:(h + 1) * R, :]                              # sublane slice
        wp_h = wproj_ref[h * D:(h + 1) * D, :].astype(jnp.float32)   # (D, C)
        acc = acc + jnp.dot(oh, wp_h, preferred_element_type=jnp.float32)

    out = acc + bproj_ref[...].astype(jnp.float32)               # (R, C)
    o_ref[...] = out.astype(o_ref.dtype)


# ------------------------------ wrapper -----------------------------------------

@jax.jit
def multi_head_attention(x, wq, wk, wv, w_proj, b_proj):
    """x: (B,T,C); wq/wk/wv: (H,C,D) in x@W layout; w_proj: (C,C) in x@W layout."""
    B, T, C = x.shape
    H, _, D = wq.shape
    scale = float(C) ** -0.5    # matches the PyTorch module: C ** (-0.5), C = n_embd

    # (H, C, D) -> (C, H*D): head h occupies columns [h*D, (h+1)*D).
    def cols(w):
        return jnp.transpose(w, (1, 0, 2)).reshape(C, H * D)

    # Fold the softmax scale into Q; interleave columns per head as [Qh|Kh|Vh].
    wqkv_s = jnp.stack([cols(wq) * scale, cols(wk), cols(wv)], axis=0)   # (3, C, H*D)
    w_qkv = (wqkv_s.reshape(3, C, H, D)
             .transpose(1, 2, 0, 3)
             .reshape(C, 3 * H * D))                                     # (C, 3*H*D)

    # Additive mask over the head-stacked (H*B*T) rows/cols: valid iff same
    # (head, batch) block and causal.  Pure constant -> folded at compile time.
    N = H * B * T
    r = jnp.arange(N)[:, None]
    c = jnp.arange(N)[None, :]
    valid = (r // T == c // T) & (c % T <= r % T)
    attn_bias = jnp.where(valid, 0.0, -1e30).astype(jnp.float32)         # (N, N)

    x2d = x.reshape(B * T, C)    # batch rows stacked -> one big matmul LHS

    out2d = pl.pallas_call(
        functools.partial(_mha_fused_kernel, num_heads=H, head_size=D),
        out_shape=jax.ShapeDtypeStruct((B * T, C), x.dtype),
        grid_spec=pltpu.PrefetchScalarGridSpec(
            num_scalar_prefetch=0,
            grid=(1,),            # single step: whole (tiny) problem resident in VMEM
            in_specs=[
                pl.BlockSpec((B * T, C), lambda i: (0, 0)),
                pl.BlockSpec((C, 3 * H * D), lambda i: (0, 0)),
                pl.BlockSpec((C, C), lambda i: (0, 0)),
                pl.BlockSpec((1, C), lambda i: (0, 0)),
                pl.BlockSpec((N, N), lambda i: (0, 0)),
            ],
            out_specs=pl.BlockSpec((B * T, C), lambda i: (0, 0)),
        ),
        compiler_params=pltpu.CompilerParams(
            dimension_semantics=("arbitrary",)),
    )(x2d, w_qkv, w_proj, b_proj.reshape(1, C), attn_bias)

    return out2d.reshape(B, T, C)


# ------------------------------ reference (plain JAX) ----------------------------

def _reference(x, wq, wk, wv, w_proj, b_proj):
    B, T, C = x.shape
    H, _, D = wq.shape
    scale = float(C) ** -0.5
    q = jnp.einsum("btc,hcd->bhtd", x, wq)
    k = jnp.einsum("btc,hcd->bhtd", x, wk)
    v = jnp.einsum("btc,hcd->bhtd", x, wv)
    s = jnp.einsum("bhtd,bhsd->bhts", q, k) * scale
    mask = jnp.tril(jnp.ones((T, T), bool))
    s = jnp.where(mask, s, -jnp.inf)
    p = jax.nn.softmax(s, axis=-1)
    o = jnp.einsum("bhts,bhsd->bhtd", p, v)
    cat = jnp.transpose(o, (0, 2, 1, 3)).reshape(B, T, H * D)
    return cat @ w_proj + b_proj


# ------------------------------------- main ---------------------------------------

if __name__ == "__main__":
    key = jax.random.PRNGKey(0)
    kx, kq, kk, kv, kp, kb = jax.random.split(key, 6)

    x = jax.random.normal(kx, (BATCH, BLOCK_SIZE, N_EMBD), jnp.float32)

    # deterministic parameter init (shapes implied by the nn.Linear layers)
    wq = jax.random.normal(kq, (NUM_HEADS, N_EMBD, HEAD_SIZE), jnp.float32) * 0.05
    wk = jax.random.normal(kk, (NUM_HEADS, N_EMBD, HEAD_SIZE), jnp.float32) * 0.05
    wv = jax.random.normal(kv, (NUM_HEADS, N_EMBD, HEAD_SIZE), jnp.float32) * 0.05
    w_proj = jax.random.normal(kp, (N_EMBD, N_EMBD), jnp.float32) * 0.05
    b_proj = jax.random.normal(kb, (N_EMBD,), jnp.float32) * 0.05

    out = multi_head_attention(x, wq, wk, wv, w_proj, b_proj)
    out = jax.block_until_ready(out)

    ref = _reference(x, wq, wk, wv, w_proj, b_proj)
    if not jnp.allclose(out, ref, atol=1e-5, rtol=1e-5):
        raise AssertionError("Pallas output mismatch vs reference")

    print("KERNEL_OK")
</pallas_src>

<mosaic_0001>
module attributes {stable_mosaic.version = 11 : i64} {
  func.func @_mha_fused_kernel(%arg0: i32, %arg1: memref<16x32xf32, #tpu.memory_space<vmem>>, %arg2: memref<32x96xf32, #tpu.memory_space<vmem>>, %arg3: memref<32x32xf32, #tpu.memory_space<vmem>>, %arg4: memref<1x32xf32, #tpu.memory_space<vmem>>, %arg5: memref<64x64xf32, #tpu.memory_space<vmem>>, %arg6: memref<16x32xf32, #tpu.memory_space<vmem>>) attributes {dimension_semantics = [#tpu.dimension_semantics<arbitrary>], iteration_bounds = array<i64: 1>, scalar_prefetch = 0 : i64, scratch_operands = 0 : i64, tpu.core_type = #tpu.core_type<tc>, window_params = [{pipeline_mode = #tpu.pipeline_mode<synchronous>, transform_indices = @transform_0, window_bounds = array<i64: 16, 32>}, {pipeline_mode = #tpu.pipeline_mode<synchronous>, transform_indices = @transform_1, window_bounds = array<i64: 32, 96>}, {pipeline_mode = #tpu.pipeline_mode<synchronous>, transform_indices = @transform_2, window_bounds = array<i64: 32, 32>}, {pipeline_mode = #tpu.pipeline_mode<synchronous>, transform_indices = @transform_3, window_bounds = array<i64: 1, 32>}, {pipeline_mode = #tpu.pipeline_mode<synchronous>, transform_indices = @transform_4, window_bounds = array<i64: 64, 64>}, {pipeline_mode = #tpu.pipeline_mode<synchronous>, transform_indices = @transform_5, window_bounds = array<i64: 16, 32>}]} {
    %c0 = arith.constant 0 : index
    %c0_0 = arith.constant 0 : index
    %0 = vector.load %arg1[%c0, %c0_0] : memref<16x32xf32, #tpu.memory_space<vmem>>, vector<16x32xf32>
    %c0_1 = arith.constant 0 : index
    %c0_2 = arith.constant 0 : index
    %1 = vector.load %arg2[%c0_1, %c0_2] : memref<32x96xf32, #tpu.memory_space<vmem>>, vector<32x96xf32>
    %cst = arith.constant dense<0.000000e+00> : vector<16x96xf32>
    %2 = tpu.matmul %0, %1, %cst {dimension_numbers = #tpu.dot_dimension_numbers<[1], [0], [0], [1], [0, 0, 1, 1], [], []>} : vector<16x32xf32>, vector<32x96xf32>, vector<16x96xf32> -> vector<16x96xf32>
    %3 = vector.extract_strided_slice %2 {offsets = [0, 0], sizes = [16, 24], strides = [1, 1]} : vector<16x96xf32> to vector<16x24xf32>
    %4 = vector.extract_strided_slice %2 {offsets = [0, 24], sizes = [16, 24], strides = [1, 1]} : vector<16x96xf32> to vector<16x24xf32>
    %5 = vector.extract_strided_slice %2 {offsets = [0, 48], sizes = [16, 24], strides = [1, 1]} : vector<16x96xf32> to vector<16x24xf32>
    %6 = vector.extract_strided_slice %2 {offsets = [0, 72], sizes = [16, 24], strides = [1, 1]} : vector<16x96xf32> to vector<16x24xf32>
    %7 = tpu.concatenate %3, %4, %5, %6 in 0 : vector<16x24xf32>, vector<16x24xf32>, vector<16x24xf32>, vector<16x24xf32> -> vector<64x24xf32>
    %8 = vector.extract_strided_slice %7 {offsets = [0, 0], sizes = [64, 8], strides = [1, 1]} : vector<64x24xf32> to vector<64x8xf32>
    %9 = vector.extract_strided_slice %7 {offsets = [0, 8], sizes = [64, 8], strides = [1, 1]} : vector<64x24xf32> to vector<64x8xf32>
    %10 = vector.extract_strided_slice %7 {offsets = [0, 16], sizes = [64, 8], strides = [1, 1]} : vector<64x24xf32> to vector<64x8xf32>
    %cst_3 = arith.constant dense<0.000000e+00> : vector<64x64xf32>
    %11 = tpu.matmul %8, %9, %cst_3 {dimension_numbers = #tpu.dot_dimension_numbers<[1], [1], [0], [0], [0, 0, 1, 0], [], []>} : vector<64x8xf32>, vector<64x8xf32>, vector<64x64xf32> -> vector<64x64xf32>
    %c0_4 = arith.constant 0 : index
    %c0_5 = arith.constant 0 : index
    %12 = vector.load %arg5[%c0_4, %c0_5] : memref<64x64xf32, #tpu.memory_space<vmem>>, vector<64x64xf32>
    %13 = arith.addf %11, %12 : vector<64x64xf32>
    %cst_6 = arith.constant dense<0xFF800000> : vector<64xf32>
    %14 = vector.multi_reduction <maximumf>, %13, %cst_6 [1] : vector<64x64xf32> to vector<64xf32>
    %15 = vector.shape_cast %14 : vector<64xf32> to vector<64x1xf32>
    %16 = vector.broadcast %15 : vector<64x1xf32> to vector<64x64xf32>
    %17 = arith.subf %13, %16 : vector<64x64xf32>
    %18 = math.exp %17 : vector<64x64xf32>
    %cst_7 = arith.constant dense<0.000000e+00> : vector<64x8xf32>
    %19 = tpu.matmul %18, %10, %cst_7 {dimension_numbers = #tpu.dot_dimension_numbers<[1], [0], [0], [1], [0, 0, 1, 1], [], []>} : vector<64x64xf32>, vector<64x8xf32>, vector<64x8xf32> -> vector<64x8xf32>
    %cst_8 = arith.constant dense<0.000000e+00> : vector<64xf32>
    %20 = vector.multi_reduction <add>, %18, %cst_8 [1] : vector<64x64xf32> to vector<64xf32>
    %21 = vector.shape_cast %20 : vector<64xf32> to vector<64x1xf32>
    %22 = tpu.reciprocal %21 : vector<64x1xf32> -> vector<64x1xf32>
    %23 = vector.broadcast %22 : vector<64x1xf32> to vector<64x8xf32>
    %24 = arith.mulf %19, %23 : vector<64x8xf32>
    %cst_9 = arith.constant 0.000000e+00 : f32
    %25 = vector.broadcast %cst_9 : f32 to vector<16x32xf32>
    %26 = vector.extract_strided_slice %24 {offsets = [0, 0], sizes = [16, 8], strides = [1, 1]} : vector<64x8xf32> to vector<16x8xf32>
    %c0_10 = arith.constant 0 : index
    %c0_11 = arith.constant 0 : index
    %27 = vector.load %arg3[%c0_10, %c0_11] : memref<32x32xf32, #tpu.memory_space<vmem>>, vector<8x32xf32>
    %cst_12 = arith.constant dense<0.000000e+00> : vector<16x32xf32>
    %28 = tpu.matmul %26, %27, %cst_12 {dimension_numbers = #tpu.dot_dimension_numbers<[1], [0], [0], [1], [0, 0, 1, 1], [], []>} : vector<16x8xf32>, vector<8x32xf32>, vector<16x32xf32> -> vector<16x32xf32>
    %29 = arith.addf %25, %28 : vector<16x32xf32>
    %30 = vector.extract_strided_slice %24 {offsets = [16, 0], sizes = [16, 8], strides = [1, 1]} : vector<64x8xf32> to vector<16x8xf32>
    %c8 = arith.constant 8 : index
    %c0_13 = arith.constant 0 : index
    %31 = vector.load %arg3[%c8, %c0_13] : memref<32x32xf32, #tpu.memory_space<vmem>>, vector<8x32xf32>
    %cst_14 = arith.constant dense<0.000000e+00> : vector<16x32xf32>
    %32 = tpu.matmul %30, %31, %cst_14 {dimension_numbers = #tpu.dot_dimension_numbers<[1], [0], [0], [1], [0, 0, 1, 1], [], []>} : vector<16x8xf32>, vector<8x32xf32>, vector<16x32xf32> -> vector<16x32xf32>
    %33 = arith.addf %29, %32 : vector<16x32xf32>
    %34 = vector.extract_strided_slice %24 {offsets = [32, 0], sizes = [16, 8], strides = [1, 1]} : vector<64x8xf32> to vector<16x8xf32>
    %c16 = arith.constant 16 : index
    %c0_15 = arith.constant 0 : index
    %35 = vector.load %arg3[%c16, %c0_15] : memref<32x32xf32, #tpu.memory_space<vmem>>, vector<8x32xf32>
    %cst_16 = arith.constant dense<0.000000e+00> : vector<16x32xf32>
    %36 = tpu.matmul %34, %35, %cst_16 {dimension_numbers = #tpu.dot_dimension_numbers<[1], [0], [0], [1], [0, 0, 1, 1], [], []>} : vector<16x8xf32>, vector<8x32xf32>, vector<16x32xf32> -> vector<16x32xf32>
    %37 = arith.addf %33, %36 : vector<16x32xf32>
    %38 = vector.extract_strided_slice %24 {offsets = [48, 0], sizes = [16, 8], strides = [1, 1]} : vector<64x8xf32> to vector<16x8xf32>
    %c24 = arith.constant 24 : index
    %c0_17 = arith.constant 0 : index
    %39 = vector.load %arg3[%c24, %c0_17] : memref<32x32xf32, #tpu.memory_space<vmem>>, vector<8x32xf32>
    %cst_18 = arith.constant dense<0.000000e+00> : vector<16x32xf32>
    %40 = tpu.matmul %38, %39, %cst_18 {dimension_numbers = #tpu.dot_dimension_numbers<[1], [0], [0], [1], [0, 0, 1, 1], [], []>} : vector<16x8xf32>, vector<8x32xf32>, vector<16x32xf32> -> vector<16x32xf32>
    %41 = arith.addf %37, %40 : vector<16x32xf32>
    %c0_19 = arith.constant 0 : index
    %c0_20 = arith.constant 0 : index
    %42 = vector.load %arg4[%c0_19, %c0_20] : memref<1x32xf32, #tpu.memory_space<vmem>>, vector<1x32xf32>
    %43 = vector.broadcast %42 : vector<1x32xf32> to vector<16x32xf32>
    %44 = arith.addf %41, %43 : vector<16x32xf32>
    %c0_21 = arith.constant 0 : index
    %c0_22 = arith.constant 0 : index
    %45 = vector.load %arg6[%c0_21, %c0_22] : memref<16x32xf32, #tpu.memory_space<vmem>>, vector<16x32xf32>
    tpu.vector_store %arg6[%c0_21, %c0_22], %44 {strides = array<i32>} : memref<16x32xf32, #tpu.memory_space<vmem>>, vector<16x32xf32>,
    return
  }
  func.func @transform_0(%arg0: i32) -> (i32, i32) {
    %c0_i32 = arith.constant 0 : i32
    %c0_i32_0 = arith.constant 0 : i32
    %c0_i32_1 = arith.constant 0 : i32
    return %c0_i32, %c0_i32_0 : i32, i32
  }
  func.func @transform_1(%arg0: i32) -> (i32, i32) {
    %c0_i32 = arith.constant 0 : i32
    %c0_i32_0 = arith.constant 0 : i32
    %c0_i32_1 = arith.constant 0 : i32
    return %c0_i32, %c0_i32_0 : i32, i32
  }
  func.func @transform_2(%arg0: i32) -> (i32, i32) {
    %c0_i32 = arith.constant 0 : i32
    %c0_i32_0 = arith.constant 0 : i32
    %c0_i32_1 = arith.constant 0 : i32
    return %c0_i32, %c0_i32_0 : i32, i32
  }
  func.func @transform_3(%arg0: i32) -> (i32, i32) {
    %c0_i32 = arith.constant 0 : i32
    %c0_i32_0 = arith.constant 0 : i32
    %c0_i32_1 = arith.constant 0 : i32
    return %c0_i32, %c0_i32_0 : i32, i32
  }
  func.func @transform_4(%arg0: i32) -> (i32, i32) {
    %c0_i32 = arith.constant 0 : i32
    %c0_i32_0 = arith.constant 0 : i32
    %c0_i32_1 = arith.constant 0 : i32
    return %c0_i32, %c0_i32_0 : i32, i32
  }
  func.func @transform_5(%arg0: i32) -> (i32, i32) {
    %c0_i32 = arith.constant 0 : i32
    %c0_i32_0 = arith.constant 0 : i32
    %c0_i32_1 = arith.constant 0 : i32
    return %c0_i32, %c0_i32_0 : i32, i32
  }
}

</mosaic_0001>

<llo_original>
// kernel: multi_head_attention.1
$region0: #{multi_head_attention.1}
  #allocation0 [shape = 'u32[]', space=smem, size = 0x4, offset = 0x4, fixed_abs, tag = 'smem constant byte address 0x4 - core index']
  #allocation1 [shape = 'u32[144,128]{1,0:T(1,128)}', space=vmem, size = 0x12000, scoped, tag = 'internal scratch']
  %s0 = inlined_call_operand.vmem [shape: f32[16,32], index: 0, kind: input, shape index: {}]
  %s1 = inlined_call_operand.vmem [shape: f32[32,96], index: 1, kind: input, shape index: {}]
  %s2 = inlined_call_operand.vmem [shape: f32[32,32], index: 2, kind: input, shape index: {}]
  %s3 = inlined_call_operand.vmem [shape: f32[1,32], index: 3, kind: input, shape index: {}]
  %s4 = inlined_call_operand.vmem [shape: f32[64,64], index: 4, kind: input, shape index: {}]
  %s5 = inlined_call_operand.hbm [shape: f32[16,32], index: 5, kind: output, shape index: {}]
  %s6 = sld [smem:[#allocation0]]
  $region30: #{multi_head_attention.1} parent=0
    _
  %s8 = ssub.s32 1, %s6
  %s9 = scalar_select 0, %s8, %s6
  $region1: #{multi_head_attention.1} parent=0
    #allocation2 [shape = 'u8[8192]{0}', space=vmem, size = 0x2000, scoped, tag = 'output window, operand 0, single buffered']
    #allocation3 [shape = 's32[1]{0}', space=sflag, size = 0x4, scoped, tag = 'scoped memory for multi_head_attention.1']
    %10 = vsyncpa [#allocation3], 0
    // Predicated region
    $region2: #{multi_head_attention.1} parent=1 // pred_check
      _
    $region3: #{multi_head_attention.1} parent=1 // pred_check_branch
      %12 = sbr.rel (0) target = $region5
    $region4: #{multi_head_attention.1} parent=1 // pred_region
      _
    $region5: #{multi_head_attention.1} parent=1 // pred_fallthru
      _
    // Predicated region
    $region6: #{multi_head_attention.1} parent=1 // pred_check
      _
    $region7: #{multi_head_attention.1} parent=1 // pred_check_branch
      %14 = sbr.rel (0) target = $region9
    $region8: #{multi_head_attention.1} parent=1 // pred_region
      _
    $region9: #{multi_head_attention.1} parent=1 // pred_fallthru
      _
    // Predicated region
    $region10: #{multi_head_attention.1} parent=1 // pred_check
      _
    $region11: #{multi_head_attention.1} parent=1 // pred_check_branch
      %16 = sbr.rel (0) target = $region13
    $region12: #{multi_head_attention.1} parent=1 // pred_region
      _
    $region13: #{multi_head_attention.1} parent=1 // pred_fallthru
      _
    // Predicated region
    $region14: #{multi_head_attention.1} parent=1 // pred_check
      _
    $region15: #{multi_head_attention.1} parent=1 // pred_check_branch
      %18 = sbr.rel (0) target = $region17
    $region16: #{multi_head_attention.1} parent=1 // pred_region
      _
    $region17: #{multi_head_attention.1} parent=1 // pred_fallthru
      _
    // Predicated region
    $region18: #{multi_head_attention.1} parent=1 // pred_check
      _
    $region19: #{multi_head_attention.1} parent=1 // pred_check_branch
      %20 = sbr.rel (0) target = $region21
    $region20: #{multi_head_attention.1} parent=1 // pred_region
      _
    $region21: #{multi_head_attention.1} parent=1 // pred_fallthru
      _
    %v21 = vld [vmem:[%s0] sm:$0xff]
    %v22 = vld [vmem:[%s0 + $0x8] sm:$0xff]
    %v23 = vld [vmem:[%s1] sm:$0xff]
    %v24 = vld [vmem:[%s1 + $0x8] sm:$0xff]
    %v25 = vld [vmem:[%s1 + $0x10] sm:$0xff]
    %v26 = vld [vmem:[%s1 + $0x18] sm:$0xff]
    %vm27 = vcmask 261120
    %v29 = vsel %vm27, %v21, 0
    %v32 = vsel %vm27, %v22, 0
    %34 = vmatprep.subr.mxu0 0.0
    %35 = vmatpush1.msra.mxu0 0.0
    %36 = vmatprep.subr.mxu0 0.0
    %37 = vmatpush1.msra.mxu0 0.0
    %38 = vmatprep.subr.mxu0 0.0
    %39 = vmatpush1.msra.mxu0 0.0
    %40 = vmatprep.subr.mxu0 0.0
    %41 = vmatpush1.msra.mxu0 0.0
    %42 = vmatprep.subr.mxu0 0.0
    %43 = vmatpush1.msra.mxu0 0.0
    %44 = vmatprep.subr.mxu0 0.0
    %45 = vmatpush1.msra.mxu0 0.0
    %46 = vmatprep.subr.mxu0 0.0
    %47 = vmatpush1.msra.mxu0 0.0
    %48 = vmatprep.subr.mxu0 0.0
    %49 = vmatpush1.msra.mxu0 0.0
    %50 = vmatprep.subr.mxu0 0.0
    %51 = vmatpush1.msra.mxu0 0.0
    %52 = vmatprep.subr.mxu0 0.0
    %53 = vmatpush1.msra.mxu0 0.0
    %54 = vmatprep.subr.mxu0 0.0
    %55 = vmatpush1.msra.mxu0 0.0
    %56 = vmatprep.subr.mxu0 0.0
    %57 = vmatpush1.msra.mxu0 0.0
    %58 = vmatprep.subr.mxu0 0.0
    %59 = vmatpush1.msra.mxu0 %v26
    %60 = vmatprep.subr.mxu0 0.0
    %61 = vmatpush1.msra.mxu0 %v25
    %62 = vmatprep.subr.mxu0 0.0
    %63 = vmatpush1.msra.mxu0 %v24
    %64 = vmatprep.subr.mxu0 0.0
    %65 = vmatpush1.msra.mxu0 %v23
    %66 = vmatprep.subr.mxu0 0.0
    %67 = vmatpush2.msra.mxu0 0.0
    %68 = vmatprep.subr.mxu0 0.0
    %69 = vmatpush2.msra.mxu0 0.0
    %70 = vmatprep.subr.mxu0 0.0
    %71 = vmatpush2.msra.mxu0 0.0
    %72 = vmatprep.subr.mxu0 0.0
    %73 = vmatpush2.msra.mxu0 0.0
    %74 = vmatprep.subr.mxu0 0.0
    %75 = vmatpush2.msra.mxu0 0.0
    %76 = vmatprep.subr.mxu0 0.0
    %77 = vmatpush2.msra.mxu0 0.0
    %78 = vmatprep.subr.mxu0 0.0
    %79 = vmatpush2.msra.mxu0 0.0
    %80 = vmatprep.subr.mxu0 0.0
    %81 = vmatpush2.msra.mxu0 0.0
    %82 = vmatprep.subr.mxu0 0.0
    %83 = vmatpush2.msra.mxu0 0.0
    %84 = vmatprep.subr.mxu0 0.0
    %85 = vmatpush2.msra.mxu0 0.0
    %86 = vmatprep.subr.mxu0 0.0
    %87 = vmatpush2.msra.mxu0 0.0
    %88 = vmatprep.subr.mxu0 0.0
    %89 = vmatpush2.msra.mxu0 0.0
    %90 = vmatprep.subr.mxu0 0.0
    %91 = vmatpush2.msra.mxu0 0.0
    %92 = vmatprep.subr.mxu0 0.0
    %93 = vmatpush2.msra.mxu0 0.0
    %94 = vmatprep.subr.mxu0 0.0
    %95 = vmatpush2.msra.mxu0 0.0
    %96 = vmatprep.subr.mxu0 0.0
    %97 = vmatpush2.msra.mxu0 0.0
    %98 = vmatprep.mubr.f32.mxu0 0.0
    %99 = vmatmul.mubr.f32.gmra.mxu0 %v29
    %v100 = vpop.f32.mrf.mxu0
    %v101 = vadd.f32 0.0, %v100
    %v102 = vpop.f32.mrf.mxu0
    %103 = vmatprep.mubr.f32.mxu0 0.0
    %104 = vmatmul.mubr.f32.gmra.mxu0 %v32
    %v105 = vpop.f32.mrf.mxu0
    %v106 = vadd.f32 0.0, %v105
    %v107 = vpop.f32.mrf.mxu0
    %108 = vdwg.mxu0
    %111 = vrot.lane.b32.xlu0 %v101, 104
    %v112 = vpop.permute.xlu0 %111
    %113 = vrot.lane.b32.xlu0 %v106, 104
    %v114 = vpop.permute.xlu0 %113
    %115 = vrot.lane.b32.xlu0 %v101, 80
    %v116 = vpop.permute.xlu0 %115
    %117 = vrot.lane.b32.xlu0 %v106, 80
    %v118 = vpop.permute.xlu0 %117
    %119 = vrot.lane.b32.xlu0 %v101, 56
    %v120 = vpop.permute.xlu0 %119
    %121 = vrot.lane.b32.xlu0 %v106, 56
    %v122 = vpop.permute.xlu0 %121
    %v123 = vld [vmem:[%s4] sm:$0xff]
    %v124 = vld [vmem:[%s4 + $0x8] sm:$0xff]
    %v125 = vld [vmem:[%s4 + $0x10] sm:$0xff]
    %v126 = vld [vmem:[%s4 + $0x18] sm:$0xff]
    %v127 = vld [vmem:[%s4 + $0x20] sm:$0xff]
    %v128 = vld [vmem:[%s4 + $0x28] sm:$0xff]
    %v129 = vld [vmem:[%s4 + $0x30] sm:$0xff]
    %v130 = vld [vmem:[%s4 + $0x38] sm:$0xff]
    %131 = vrot.lane.b32.xlu0 %v101, 120
    %v132 = vpop.permute.xlu0 %131
    %133 = vrot.lane.b32.xlu0 %v106, 120
    %v134 = vpop.permute.xlu0 %133
    %135 = vrot.lane.b32.xlu0 %v112, 120
    %v136 = vpop.permute.xlu0 %135
    %137 = vrot.lane.b32.xlu0 %v114, 120
    %v138 = vpop.permute.xlu0 %137
    %139 = vrot.lane.b32.xlu0 %v116, 120
    %v140 = vpop.permute.xlu0 %139
    %141 = vrot.lane.b32.xlu0 %v118, 120
    %v142 = vpop.permute.xlu0 %141
    %143 = vrot.lane.b32.xlu0 %v120, 120
    %v144 = vpop.permute.xlu0 %143
    %145 = vrot.lane.b32.xlu0 %v122, 120
    %v146 = vpop.permute.xlu0 %145
    %vm147 = vcmask 64512
    %v148 = vsel %vm147, %v101, 0
    %v150 = vsel %vm147, %v106, 0
    %v152 = vsel %vm147, %v112, 0
    %v154 = vsel %vm147, %v114, 0
    %v156 = vsel %vm147, %v116, 0
    %v158 = vsel %vm147, %v118, 0
    %v160 = vsel %vm147, %v120, 0
    %v162 = vsel %vm147, %v122, 0
    %v164 = vsel %vm147, %v132, 0
    %v166 = vsel %vm147, %v134, 0
    %v168 = vsel %vm147, %v136, 0
    %v170 = vsel %vm147, %v138, 0
    %v172 = vsel %vm147, %v140, 0
    %v174 = vsel %vm147, %v142, 0
    %v176 = vsel %vm147, %v144, 0
    %v178 = vsel %vm147, %v146, 0
    %180 = vmatprep.subr.mxu0 0.0
    %181 = vmatpush1.xpose.msra.mxu0 0.0
    %182 = vmatprep.subr.mxu0 0.0
    %183 = vmatpush1.xpose.msra.mxu0 0.0
    %184 = vmatprep.subr.mxu0 0.0
    %185 = vmatpush1.xpose.msra.mxu0 0.0
    %186 = vmatprep.subr.mxu0 0.0
    %187 = vmatpush1.xpose.msra.mxu0 0.0
    %188 = vmatprep.subr.mxu0 0.0
    %189 = vmatpush1.xpose.msra.mxu0 0.0
    %190 = vmatprep.subr.mxu0 0.0
    %191 = vmatpush1.xpose.msra.mxu0 0.0
    %192 = vmatprep.subr.mxu0 0.0
    %193 = vmatpush1.xpose.msra.mxu0 0.0
    %194 = vmatprep.subr.mxu0 0.0
    %195 = vmatpush1.xpose.msra.mxu0 0.0
    %196 = vmatprep.subr.mxu0 0.0
    %197 = vmatpush1.xpose.msra.mxu0 %v178
    %198 = vmatprep.subr.mxu0 0.0
    %199 = vmatpush1.xpose.msra.mxu0 %v176
    %200 = vmatprep.subr.mxu0 0.0
    %201 = vmatpush1.xpose.msra.mxu0 %v174
    %202 = vmatprep.subr.mxu0 0.0
    %203 = vmatpush1.xpose.msra.mxu0 %v172
    %204 = vmatprep.subr.mxu0 0.0
    %205 = vmatpush1.xpose.msra.mxu0 %v170
    %206 = vmatprep.subr.mxu0 0.0
    %207 = vmatpush1.xpose.msra.mxu0 %v168
    %208 = vmatprep.subr.mxu0 0.0
    %209 = vmatpush1.xpose.msra.mxu0 %v166
    %210 = vmatprep.subr.mxu0 0.0
    %211 = vmatpush1.xpose.msra.mxu0 %v164
    %212 = vmatprep.subr.mxu0 0.0
    %213 = vmatpush2.xpose.msra.mxu0 0.0
    %214 = vmatprep.subr.mxu0 0.0
    %215 = vmatpush2.xpose.msra.mxu0 0.0
    %216 = vmatprep.subr.mxu0 0.0
    %217 = vmatpush2.xpose.msra.mxu0 0.0
    %218 = vmatprep.subr.mxu0 0.0
    %219 = vmatpush2.xpose.msra.mxu0 0.0
    %220 = vmatprep.subr.mxu0 0.0
    %221 = vmatpush2.xpose.msra.mxu0 0.0
    %222 = vmatprep.subr.mxu0 0.0
    %223 = vmatpush2.xpose.msra.mxu0 0.0
    %224 = vmatprep.subr.mxu0 0.0
    %225 = vmatpush2.xpose.msra.mxu0 0.0
    %226 = vmatprep.subr.mxu0 0.0
    %227 = vmatpush2.xpose.msra.mxu0 0.0
    %228 = vmatprep.subr.mxu0 0.0
    %229 = vmatpush2.xpose.msra.mxu0 0.0
    %230 = vmatprep.subr.mxu0 0.0
    %231 = vmatpush2.xpose.msra.mxu0 0.0
    %232 = vmatprep.subr.mxu0 0.0
    %233 = vmatpush2.xpose.msra.mxu0 0.0
    %234 = vmatprep.subr.mxu0 0.0
    %235 = vmatpush2.xpose.msra.mxu0 0.0
    %236 = vmatprep.subr.mxu0 0.0
    %237 = vmatpush2.xpose.msra.mxu0 0.0
    %238 = vmatprep.subr.mxu0 0.0
    %239 = vmatpush2.xpose.msra.mxu0 0.0
    %240 = vmatprep.subr.mxu0 0.0
    %241 = vmatpush2.xpose.msra.mxu0 0.0
    %242 = vmatprep.subr.mxu0 0.0
    %243 = vmatpush2.xpose.msra.mxu0 0.0
    %244 = vmatprep.mubr.f32.mxu0 0.0
    %245 = vmatmul.mubr.f32.gmra.mxu0 %v148
    %v246 = vpop.f32.mrf.mxu0
    %v247 = vadd.f32 %v123, %v246
    %v248 = vpop.f32.mrf.mxu0
    %249 = vmatprep.mubr.f32.mxu0 0.0
    %250 = vmatmul.mubr.f32.gmra.mxu0 %v150
    %v251 = vpop.f32.mrf.mxu0
    %v252 = vadd.f32 %v124, %v251
    %v253 = vpop.f32.mrf.mxu0
    %254 = vmatprep.mubr.f32.mxu0 0.0
    %255 = vmatmul.mubr.f32.gmra.mxu0 %v152
    %v256 = vpop.f32.mrf.mxu0
    %v257 = vadd.f32 %v125, %v256
    %v258 = vpop.f32.mrf.mxu0
    %259 = vmatprep.mubr.f32.mxu0 0.0
    %260 = vmatmul.mubr.f32.gmra.mxu0 %v154
    %v261 = vpop.f32.mrf.mxu0
    %v262 = vadd.f32 %v126, %v261
    %v263 = vpop.f32.mrf.mxu0
    %264 = vmatprep.mubr.f32.mxu0 0.0
    %265 = vmatmul.mubr.f32.gmra.mxu0 %v156
    %v266 = vpop.f32.mrf.mxu0
    %v267 = vadd.f32 %v127, %v266
    %v268 = vpop.f32.mrf.mxu0
    %269 = vmatprep.mubr.f32.mxu0 0.0
    %270 = vmatmul.mubr.f32.gmra.mxu0 %v158
    %v271 = vpop.f32.mrf.mxu0
    %v272 = vadd.f32 %v128, %v271
    %v273 = vpop.f32.mrf.mxu0
    %274 = vmatprep.mubr.f32.mxu0 0.0
    %275 = vmatmul.mubr.f32.gmra.mxu0 %v160
    %v276 = vpop.f32.mrf.mxu0
    %v277 = vadd.f32 %v129, %v276
    %v278 = vpop.f32.mrf.mxu0
    %279 = vmatprep.mubr.f32.mxu0 0.0
    %280 = vmatmul.mubr.f32.gmra.mxu0 %v162
    %v281 = vpop.f32.mrf.mxu0
    %v282 = vadd.f32 %v130, %v281
    %v283 = vpop.f32.mrf.mxu0
    %284 = vdwg.mxu0
    %vm285 = vcmask 523264
    %v286 = vsel %vm285, %v247, -inf
    %287 = vmax.xlane.f32.xlu0 %v286
    %v288 = vpop.xlane.xlu0 %287
    %v289 = vsel %vm285, %v252, -inf
    %290 = vmax.xlane.f32.xlu0 %v289
    %v291 = vpop.xlane.xlu0 %290
    %v292 = vsel %vm285, %v257, -inf
    %293 = vmax.xlane.f32.xlu0 %v292
    %v294 = vpop.xlane.xlu0 %293
    %v295 = vsel %vm285, %v262, -inf
    %296 = vmax.xlane.f32.xlu0 %v295
    %v297 = vpop.xlane.xlu0 %296
    %v298 = vsel %vm285, %v267, -inf
    %299 = vmax.xlane.f32.xlu0 %v298
    %v300 = vpop.xlane.xlu0 %299
    %v301 = vsel %vm285, %v272, -inf
    %302 = vmax.xlane.f32.xlu0 %v301
    %v303 = vpop.xlane.xlu0 %302
    %v304 = vsel %vm285, %v277, -inf
    %305 = vmax.xlane.f32.xlu0 %v304
    %v306 = vpop.xlane.xlu0 %305
    %v307 = vsel %vm285, %v282, -inf
    %308 = vmax.xlane.f32.xlu0 %v307
    %v309 = vpop.xlane.xlu0 %308
    %v310 = vsub.f32 %v247, %v288
    %v311 = vsub.f32 %v252, %v291
    %v312 = vsub.f32 %v257, %v294
    %v313 = vsub.f32 %v262, %v297
    %v314 = vsub.f32 %v267, %v300
    %v315 = vsub.f32 %v272, %v303
    %v316 = vsub.f32 %v277, %v306
    %v317 = vsub.f32 %v282, %v309
    %v318 = vmul.f32 %v310, 1.442695
    %v319 = vpow.pop %v318
    %v320 = vmul.f32 %v311, 1.442695
    %v321 = vpow.pop %v320
    %v322 = vmul.f32 %v312, 1.442695
    %v323 = vpow.pop %v322
    %v324 = vmul.f32 %v313, 1.442695
    %v325 = vpow.pop %v324
    %v326 = vmul.f32 %v314, 1.442695
    %v327 = vpow.pop %v326
    %v328 = vmul.f32 %v315, 1.442695
    %v329 = vpow.pop %v328
    %v330 = vmul.f32 %v316, 1.442695
    %v331 = vpow.pop %v330
    %v332 = vmul.f32 %v317, 1.442695
    %v333 = vpow.pop %v332
    %334 = vrot.lane.b32.xlu0 %v101, 112
    %v335 = vpop.permute.xlu0 %334
    %336 = vrot.lane.b32.xlu0 %v106, 112
    %v337 = vpop.permute.xlu0 %336
    %338 = vrot.lane.b32.xlu0 %v112, 112
    %v339 = vpop.permute.xlu0 %338
    %340 = vrot.lane.b32.xlu0 %v114, 112
    %v341 = vpop.permute.xlu0 %340
    %342 = vrot.lane.b32.xlu0 %v116, 112
    %v343 = vpop.permute.xlu0 %342
    %344 = vrot.lane.b32.xlu0 %v118, 112
    %v345 = vpop.permute.xlu0 %344
    %346 = vrot.lane.b32.xlu0 %v120, 112
    %v347 = vpop.permute.xlu0 %346
    %348 = vrot.lane.b32.xlu0 %v122, 112
    %v349 = vpop.permute.xlu0 %348
    %v359 = vsel %vm285, %v319, 0
    %v362 = vsel %vm285, %v321, 0
    %v365 = vsel %vm285, %v323, 0
    %v368 = vsel %vm285, %v325, 0
    %v371 = vsel %vm285, %v327, 0
    %v374 = vsel %vm285, %v329, 0
    %v377 = vsel %vm285, %v331, 0
    %v380 = vsel %vm285, %v333, 0
    %382 = vmatprep.subr.mxu0 0.0
    %383 = vmatpush1.msra.mxu0 0.0
    %384 = vmatprep.subr.mxu0 0.0
    %385 = vmatpush1.msra.mxu0 0.0
    %386 = vmatprep.subr.mxu0 0.0
    %387 = vmatpush1.msra.mxu0 0.0
    %388 = vmatprep.subr.mxu0 0.0
    %389 = vmatpush1.msra.mxu0 0.0
    %390 = vmatprep.subr.mxu0 0.0
    %391 = vmatpush1.msra.mxu0 0.0
    %392 = vmatprep.subr.mxu0 0.0
    %393 = vmatpush1.msra.mxu0 0.0
    %394 = vmatprep.subr.mxu0 0.0
    %395 = vmatpush1.msra.mxu0 0.0
    %396 = vmatprep.subr.mxu0 0.0
    %397 = vmatpush1.msra.mxu0 0.0
    %398 = vmatprep.subr.mxu0 0.0
    %399 = vmatpush1.msra.mxu0 %v349
    %400 = vmatprep.subr.mxu0 0.0
    %401 = vmatpush1.msra.mxu0 %v347
    %402 = vmatprep.subr.mxu0 0.0
    %403 = vmatpush1.msra.mxu0 %v345
    %404 = vmatprep.subr.mxu0 0.0
    %405 = vmatpush1.msra.mxu0 %v343
    %406 = vmatprep.subr.mxu0 0.0
    %407 = vmatpush1.msra.mxu0 %v341
    %408 = vmatprep.subr.mxu0 0.0
    %409 = vmatpush1.msra.mxu0 %v339
    %410 = vmatprep.subr.mxu0 0.0
    %411 = vmatpush1.msra.mxu0 %v337
    %412 = vmatprep.subr.mxu0 0.0
    %413 = vmatpush1.msra.mxu0 %v335
    %414 = vmatprep.subr.mxu0 0.0
    %415 = vmatpush2.msra.mxu0 0.0
    %416 = vmatprep.subr.mxu0 0.0
    %417 = vmatpush2.msra.mxu0 0.0
    %418 = vmatprep.subr.mxu0 0.0
    %419 = vmatpush2.msra.mxu0 0.0
    %420 = vmatprep.subr.mxu0 0.0
    %421 = vmatpush2.msra.mxu0 0.0
    %422 = vmatprep.subr.mxu0 0.0
    %423 = vmatpush2.msra.mxu0 0.0
    %424 = vmatprep.subr.mxu0 0.0
    %425 = vmatpush2.msra.mxu0 0.0
    %426 = vmatprep.subr.mxu0 0.0
    %427 = vmatpush2.msra.mxu0 0.0
    %428 = vmatprep.subr.mxu0 0.0
    %429 = vmatpush2.msra.mxu0 0.0
    %430 = vmatprep.subr.mxu0 0.0
    %431 = vmatpush2.msra.mxu0 0.0
    %432 = vmatprep.subr.mxu0 0.0
    %433 = vmatpush2.msra.mxu0 0.0
    %434 = vmatprep.subr.mxu0 0.0
    %435 = vmatpush2.msra.mxu0 0.0
    %436 = vmatprep.subr.mxu0 0.0
    %437 = vmatpush2.msra.mxu0 0.0
    %438 = vmatprep.subr.mxu0 0.0
    %439 = vmatpush2.msra.mxu0 0.0
    %440 = vmatprep.subr.mxu0 0.0
    %441 = vmatpush2.msra.mxu0 0.0
    %442 = vmatprep.subr.mxu0 0.0
    %443 = vmatpush2.msra.mxu0 0.0
    %444 = vmatprep.subr.mxu0 0.0
    %445 = vmatpush2.msra.mxu0 0.0
    %446 = vmatprep.mubr.f32.mxu0 0.0
    %447 = vmatmul.mubr.f32.gmra.mxu0 %v359
    %v448 = vpop.f32.mrf.mxu0
    %v449 = vadd.f32 0.0, %v448
    %v450 = vpop.f32.mrf.mxu0
    %451 = vmatprep.mubr.f32.mxu0 0.0
    %452 = vmatmul.mubr.f32.gmra.mxu0 %v362
    %v453 = vpop.f32.mrf.mxu0
    %v454 = vadd.f32 0.0, %v453
    %v455 = vpop.f32.mrf.mxu0
    %456 = vmatprep.mubr.f32.mxu0 0.0
    %457 = vmatmul.mubr.f32.gmra.mxu0 %v365
    %v458 = vpop.f32.mrf.mxu0
    %v459 = vadd.f32 0.0, %v458
    %v460 = vpop.f32.mrf.mxu0
    %461 = vmatprep.mubr.f32.mxu0 0.0
    %462 = vmatmul.mubr.f32.gmra.mxu0 %v368
    %v463 = vpop.f32.mrf.mxu0
    %v464 = vadd.f32 0.0, %v463
    %v465 = vpop.f32.mrf.mxu0
    %466 = vmatprep.mubr.f32.mxu0 0.0
    %467 = vmatmul.mubr.f32.gmra.mxu0 %v371
    %v468 = vpop.f32.mrf.mxu0
    %v469 = vadd.f32 0.0, %v468
    %v470 = vpop.f32.mrf.mxu0
    %471 = vmatprep.mubr.f32.mxu0 0.0
    %472 = vmatmul.mubr.f32.gmra.mxu0 %v374
    %v473 = vpop.f32.mrf.mxu0
    %v474 = vadd.f32 0.0, %v473
    %v475 = vpop.f32.mrf.mxu0
    %476 = vmatprep.mubr.f32.mxu0 0.0
    %477 = vmatmul.mubr.f32.gmra.mxu0 %v377
    %v478 = vpop.f32.mrf.mxu0
    %v479 = vadd.f32 0.0, %v478
    %v480 = vpop.f32.mrf.mxu0
    %481 = vmatprep.mubr.f32.mxu0 0.0
    %482 = vmatmul.mubr.f32.gmra.mxu0 %v380
    %v483 = vpop.f32.mrf.mxu0
    %v484 = vadd.f32 0.0, %v483
    %v485 = vpop.f32.mrf.mxu0
    %486 = vdwg.mxu0
    %v487 = vsel %vm285, %v319, 0.0
    %488 = vadd.xlane.f32.xlu0 %v487
    %v489 = vpop.xlane.xlu0 %488
    %v490 = vsel %vm285, %v321, 0.0
    %491 = vadd.xlane.f32.xlu0 %v490
    %v492 = vpop.xlane.xlu0 %491
    %v493 = vsel %vm285, %v323, 0.0
    %494 = vadd.xlane.f32.xlu0 %v493
    %v495 = vpop.xlane.xlu0 %494
    %v496 = vsel %vm285, %v325, 0.0
    %497 = vadd.xlane.f32.xlu0 %v496
    %v498 = vpop.xlane.xlu0 %497
    %v499 = vsel %vm285, %v327, 0.0
    %500 = vadd.xlane.f32.xlu0 %v499
    %v501 = vpop.xlane.xlu0 %500
    %v502 = vsel %vm285, %v329, 0.0
    %503 = vadd.xlane.f32.xlu0 %v502
    %v504 = vpop.xlane.xlu0 %503
    %v505 = vsel %vm285, %v331, 0.0
    %506 = vadd.xlane.f32.xlu0 %v505
    %v507 = vpop.xlane.xlu0 %506
    %v508 = vsel %vm285, %v333, 0.0
    %509 = vadd.xlane.f32.xlu0 %v508
    %v510 = vpop.xlane.xlu0 %509
    %v511 = vrcp.pop %v489
    %v512 = vrcp.pop %v492
    %v513 = vrcp.pop %v495
    %v514 = vrcp.pop %v498
    %v515 = vrcp.pop %v501
    %v516 = vrcp.pop %v504
    %v517 = vrcp.pop %v507
    %v518 = vrcp.pop %v510
    %v519 = vmul.f32 %v449, %v511
    %v520 = vmul.f32 %v454, %v512
    %v521 = vmul.f32 %v459, %v513
    %v522 = vmul.f32 %v464, %v514
    %v523 = vmul.f32 %v469, %v515
    %v524 = vmul.f32 %v474, %v516
    %v525 = vmul.f32 %v479, %v517
    %v526 = vmul.f32 %v484, %v518
    %v527 = vld [vmem:[%s2] sm:$0xff]
    %v528 = vld [vmem:[%s2 + $0x8] sm:$0xff]
    %v530 = vsel %vm147, %v521, 0
    %v533 = vsel %vm147, %v522, 0
    %535 = vmatprep.subr.mxu0 0.0
    %536 = vmatpush1.msra.mxu0 0.0
    %537 = vmatprep.subr.mxu0 0.0
    %538 = vmatpush1.msra.mxu0 0.0
    %539 = vmatprep.subr.mxu0 0.0
    %540 = vmatpush1.msra.mxu0 0.0
    %541 = vmatprep.subr.mxu0 0.0
    %542 = vmatpush1.msra.mxu0 0.0
    %543 = vmatprep.subr.mxu0 0.0
    %544 = vmatpush1.msra.mxu0 0.0
    %545 = vmatprep.subr.mxu0 0.0
    %546 = vmatpush1.msra.mxu0 0.0
    %547 = vmatprep.subr.mxu0 0.0
    %548 = vmatpush1.msra.mxu0 0.0
    %549 = vmatprep.subr.mxu0 0.0
    %550 = vmatpush1.msra.mxu0 0.0
    %551 = vmatprep.subr.mxu0 0.0
    %552 = vmatpush1.msra.mxu0 0.0
    %553 = vmatprep.subr.mxu0 0.0
    %554 = vmatpush1.msra.mxu0 0.0
    %555 = vmatprep.subr.mxu0 0.0
    %556 = vmatpush1.msra.mxu0 0.0
    %557 = vmatprep.subr.mxu0 0.0
    %558 = vmatpush1.msra.mxu0 0.0
    %559 = vmatprep.subr.mxu0 0.0
    %560 = vmatpush1.msra.mxu0 0.0
    %561 = vmatprep.subr.mxu0 0.0
    %562 = vmatpush1.msra.mxu0 0.0
    %563 = vmatprep.subr.mxu0 0.0
    %564 = vmatpush1.msra.mxu0 0.0
    %565 = vmatprep.subr.mxu0 0.0
    %566 = vmatpush1.msra.mxu0 %v528
    %567 = vmatprep.subr.mxu0 0.0
    %568 = vmatpush2.msra.mxu0 0.0
    %569 = vmatprep.subr.mxu0 0.0
    %570 = vmatpush2.msra.mxu0 0.0
    %571 = vmatprep.subr.mxu0 0.0
    %572 = vmatpush2.msra.mxu0 0.0
    %573 = vmatprep.subr.mxu0 0.0
    %574 = vmatpush2.msra.mxu0 0.0
    %575 = vmatprep.subr.mxu0 0.0
    %576 = vmatpush2.msra.mxu0 0.0
    %577 = vmatprep.subr.mxu0 0.0
    %578 = vmatpush2.msra.mxu0 0.0
    %579 = vmatprep.subr.mxu0 0.0
    %580 = vmatpush2.msra.mxu0 0.0
    %581 = vmatprep.subr.mxu0 0.0
    %582 = vmatpush2.msra.mxu0 0.0
    %583 = vmatprep.subr.mxu0 0.0
    %584 = vmatpush2.msra.mxu0 0.0
    %585 = vmatprep.subr.mxu0 0.0
    %586 = vmatpush2.msra.mxu0 0.0
    %587 = vmatprep.subr.mxu0 0.0
    %588 = vmatpush2.msra.mxu0 0.0
    %589 = vmatprep.subr.mxu0 0.0
    %590 = vmatpush2.msra.mxu0 0.0
    %591 = vmatprep.subr.mxu0 0.0
    %592 = vmatpush2.msra.mxu0 0.0
    %593 = vmatprep.subr.mxu0 0.0
    %594 = vmatpush2.msra.mxu0 0.0
    %595 = vmatprep.subr.mxu0 0.0
    %596 = vmatpush2.msra.mxu0 0.0
    %597 = vmatprep.subr.mxu0 0.0
    %598 = vmatpush2.msra.mxu0 0.0
    %599 = vmatprep.mubr.f32.mxu0 0.0
    %600 = vmatmul.mubr.f32.gmra.mxu0 %v530
    %v601 = vpop.f32.mrf.mxu0
    %v602 = vadd.f32 0.0, %v601
    %v603 = vpop.f32.mrf.mxu0
    %604 = vmatprep.mubr.f32.mxu0 0.0
    %605 = vmatmul.mubr.f32.gmra.mxu0 %v533
    %v606 = vpop.f32.mrf.mxu0
    %v607 = vadd.f32 0.0, %v606
    %v608 = vpop.f32.mrf.mxu0
    %609 = vdwg.mxu0
    %v611 = vsel %vm147, %v519, 0
    %v614 = vsel %vm147, %v520, 0
    %616 = vmatprep.subr.mxu0 0.0
    %617 = vmatpush1.msra.mxu0 0.0
    %618 = vmatprep.subr.mxu0 0.0
    %619 = vmatpush1.msra.mxu0 0.0
    %620 = vmatprep.subr.mxu0 0.0
    %621 = vmatpush1.msra.mxu0 0.0
    %622 = vmatprep.subr.mxu0 0.0
    %623 = vmatpush1.msra.mxu0 0.0
    %624 = vmatprep.subr.mxu0 0.0
    %625 = vmatpush1.msra.mxu0 0.0
    %626 = vmatprep.subr.mxu0 0.0
    %627 = vmatpush1.msra.mxu0 0.0
    %628 = vmatprep.subr.mxu0 0.0
    %629 = vmatpush1.msra.mxu0 0.0
    %630 = vmatprep.subr.mxu0 0.0
    %631 = vmatpush1.msra.mxu0 0.0
    %632 = vmatprep.subr.mxu0 0.0
    %633 = vmatpush1.msra.mxu0 0.0
    %634 = vmatprep.subr.mxu0 0.0
    %635 = vmatpush1.msra.mxu0 0.0
    %636 = vmatprep.subr.mxu0 0.0
    %637 = vmatpush1.msra.mxu0 0.0
    %638 = vmatprep.subr.mxu0 0.0
    %639 = vmatpush1.msra.mxu0 0.0
    %640 = vmatprep.subr.mxu0 0.0
    %641 = vmatpush1.msra.mxu0 0.0
    %642 = vmatprep.subr.mxu0 0.0
    %643 = vmatpush1.msra.mxu0 0.0
    %644 = vmatprep.subr.mxu0 0.0
    %645 = vmatpush1.msra.mxu0 0.0
    %646 = vmatprep.subr.mxu0 0.0
    %647 = vmatpush1.msra.mxu0 %v527
    %648 = vmatprep.subr.mxu0 0.0
    %649 = vmatpush2.msra.mxu0 0.0
    %650 = vmatprep.subr.mxu0 0.0
    %651 = vmatpush2.msra.mxu0 0.0
    %652 = vmatprep.subr.mxu0 0.0
    %653 = vmatpush2.msra.mxu0 0.0
    %654 = vmatprep.subr.mxu0 0.0
    %655 = vmatpush2.msra.mxu0 0.0
    %656 = vmatprep.subr.mxu0 0.0
    %657 = vmatpush2.msra.mxu0 0.0
    %658 = vmatprep.subr.mxu0 0.0
    %659 = vmatpush2.msra.mxu0 0.0
    %660 = vmatprep.subr.mxu0 0.0
    %661 = vmatpush2.msra.mxu0 0.0
    %662 = vmatprep.subr.mxu0 0.0
    %663 = vmatpush2.msra.mxu0 0.0
    %664 = vmatprep.subr.mxu0 0.0
    %665 = vmatpush2.msra.mxu0 0.0
    %666 = vmatprep.subr.mxu0 0.0
    %667 = vmatpush2.msra.mxu0 0.0
    %668 = vmatprep.subr.mxu0 0.0
    %669 = vmatpush2.msra.mxu0 0.0
    %670 = vmatprep.subr.mxu0 0.0
    %671 = vmatpush2.msra.mxu0 0.0
    %672 = vmatprep.subr.mxu0 0.0
    %673 = vmatpush2.msra.mxu0 0.0
    %674 = vmatprep.subr.mxu0 0.0
    %675 = vmatpush2.msra.mxu0 0.0
    %676 = vmatprep.subr.mxu0 0.0
    %677 = vmatpush2.msra.mxu0 0.0
    %678 = vmatprep.subr.mxu0 0.0
    %679 = vmatpush2.msra.mxu0 0.0
    %680 = vmatprep.mubr.f32.mxu0 0.0
    %681 = vmatmul.mubr.f32.gmra.mxu0 %v611
    %v682 = vpop.f32.mrf.mxu0
    %v683 = vadd.f32 %v602, %v682
    %v684 = vpop.f32.mrf.mxu0
    %685 = vmatprep.mubr.f32.mxu0 0.0
    %686 = vmatmul.mubr.f32.gmra.mxu0 %v614
    %v687 = vpop.f32.mrf.mxu0
    %v688 = vadd.f32 %v607, %v687
    %v689 = vpop.f32.mrf.mxu0
    %690 = vdwg.mxu0
    %v691 = vld [vmem:[%s2 + $0x10] sm:$0xff]
    %v693 = vsel %vm147, %v523, 0
    %v696 = vsel %vm147, %v524, 0
    %698 = vmatprep.subr.mxu0 0.0
    %699 = vmatpush1.msra.mxu0 0.0
    %700 = vmatprep.subr.mxu0 0.0
    %701 = vmatpush1.msra.mxu0 0.0
    %702 = vmatprep.subr.mxu0 0.0
    %703 = vmatpush1.msra.mxu0 0.0
    %704 = vmatprep.subr.mxu0 0.0
    %705 = vmatpush1.msra.mxu0 0.0
    %706 = vmatprep.subr.mxu0 0.0
    %707 = vmatpush1.msra.mxu0 0.0
    %708 = vmatprep.subr.mxu0 0.0
    %709 = vmatpush1.msra.mxu0 0.0
    %710 = vmatprep.subr.mxu0 0.0
    %711 = vmatpush1.msra.mxu0 0.0
    %712 = vmatprep.subr.mxu0 0.0
    %713 = vmatpush1.msra.mxu0 0.0
    %714 = vmatprep.subr.mxu0 0.0
    %715 = vmatpush1.msra.mxu0 0.0
    %716 = vmatprep.subr.mxu0 0.0
    %717 = vmatpush1.msra.mxu0 0.0
    %718 = vmatprep.subr.mxu0 0.0
    %719 = vmatpush1.msra.mxu0 0.0
    %720 = vmatprep.subr.mxu0 0.0
    %721 = vmatpush1.msra.mxu0 0.0
    %722 = vmatprep.subr.mxu0 0.0
    %723 = vmatpush1.msra.mxu0 0.0
    %724 = vmatprep.subr.mxu0 0.0
    %725 = vmatpush1.msra.mxu0 0.0
    %726 = vmatprep.subr.mxu0 0.0
    %727 = vmatpush1.msra.mxu0 0.0
    %728 = vmatprep.subr.mxu0 0.0
    %729 = vmatpush1.msra.mxu0 %v691
    %730 = vmatprep.subr.mxu0 0.0
    %731 = vmatpush2.msra.mxu0 0.0
    %732 = vmatprep.subr.mxu0 0.0
    %733 = vmatpush2.msra.mxu0 0.0
    %734 = vmatprep.subr.mxu0 0.0
    %735 = vmatpush2.msra.mxu0 0.0
    %736 = vmatprep.subr.mxu0 0.0
    %737 = vmatpush2.msra.mxu0 0.0
    %738 = vmatprep.subr.mxu0 0.0
    %739 = vmatpush2.msra.mxu0 0.0
    %740 = vmatprep.subr.mxu0 0.0
    %741 = vmatpush2.msra.mxu0 0.0
    %742 = vmatprep.subr.mxu0 0.0
    %743 = vmatpush2.msra.mxu0 0.0
    %744 = vmatprep.subr.mxu0 0.0
    %745 = vmatpush2.msra.mxu0 0.0
    %746 = vmatprep.subr.mxu0 0.0
    %747 = vmatpush2.msra.mxu0 0.0
    %748 = vmatprep.subr.mxu0 0.0
    %749 = vmatpush2.msra.mxu0 0.0
    %750 = vmatprep.subr.mxu0 0.0
    %751 = vmatpush2.msra.mxu0 0.0
    %752 = vmatprep.subr.mxu0 0.0
    %753 = vmatpush2.msra.mxu0 0.0
    %754 = vmatprep.subr.mxu0 0.0
    %755 = vmatpush2.msra.mxu0 0.0
    %756 = vmatprep.subr.mxu0 0.0
    %757 = vmatpush2.msra.mxu0 0.0
    %758 = vmatprep.subr.mxu0 0.0
    %759 = vmatpush2.msra.mxu0 0.0
    %760 = vmatprep.subr.mxu0 0.0
    %761 = vmatpush2.msra.mxu0 0.0
    %762 = vmatprep.mubr.f32.mxu0 0.0
    %763 = vmatmul.mubr.f32.gmra.mxu0 %v693
    %v764 = vpop.f32.mrf.mxu0
    %v765 = vadd.f32 0.0, %v764
    %v766 = vpop.f32.mrf.mxu0
    %767 = vmatprep.mubr.f32.mxu0 0.0
    %768 = vmatmul.mubr.f32.gmra.mxu0 %v696
    %v769 = vpop.f32.mrf.mxu0
    %v770 = vadd.f32 0.0, %v769
    %v771 = vpop.f32.mrf.mxu0
    %772 = vdwg.mxu0
    %v773 = vadd.f32 %v683, %v765
    %v774 = vadd.f32 %v688, %v770
    %v775 = vld [vmem:[%s2 + $0x18] sm:$0xff]
    %v777 = vsel %vm147, %v525, 0
    %v780 = vsel %vm147, %v526, 0
    %782 = vmatprep.subr.mxu0 0.0
    %783 = vmatpush1.msra.mxu0 0.0
    %784 = vmatprep.subr.mxu0 0.0
    %785 = vmatpush1.msra.mxu0 0.0
    %786 = vmatprep.subr.mxu0 0.0
    %787 = vmatpush1.msra.mxu0 0.0
    %788 = vmatprep.subr.mxu0 0.0
    %789 = vmatpush1.msra.mxu0 0.0
    %790 = vmatprep.subr.mxu0 0.0
    %791 = vmatpush1.msra.mxu0 0.0
    %792 = vmatprep.subr.mxu0 0.0
    %793 = vmatpush1.msra.mxu0 0.0
    %794 = vmatprep.subr.mxu0 0.0
    %795 = vmatpush1.msra.mxu0 0.0
    %796 = vmatprep.subr.mxu0 0.0
    %797 = vmatpush1.msra.mxu0 0.0
    %798 = vmatprep.subr.mxu0 0.0
    %799 = vmatpush1.msra.mxu0 0.0
    %800 = vmatprep.subr.mxu0 0.0
    %801 = vmatpush1.msra.mxu0 0.0
    %802 = vmatprep.subr.mxu0 0.0
    %803 = vmatpush1.msra.mxu0 0.0
    %804 = vmatprep.subr.mxu0 0.0
    %805 = vmatpush1.msra.mxu0 0.0
    %806 = vmatprep.subr.mxu0 0.0
    %807 = vmatpush1.msra.mxu0 0.0
    %808 = vmatprep.subr.mxu0 0.0
    %809 = vmatpush1.msra.mxu0 0.0
    %810 = vmatprep.subr.mxu0 0.0
    %811 = vmatpush1.msra.mxu0 0.0
    %812 = vmatprep.subr.mxu0 0.0
    %813 = vmatpush1.msra.mxu0 %v775
    %814 = vmatprep.subr.mxu0 0.0
    %815 = vmatpush2.msra.mxu0 0.0
    %816 = vmatprep.subr.mxu0 0.0
    %817 = vmatpush2.msra.mxu0 0.0
    %818 = vmatprep.subr.mxu0 0.0
    %819 = vmatpush2.msra.mxu0 0.0
    %820 = vmatprep.subr.mxu0 0.0
    %821 = vmatpush2.msra.mxu0 0.0
    %822 = vmatprep.subr.mxu0 0.0
    %823 = vmatpush2.msra.mxu0 0.0
    %824 = vmatprep.subr.mxu0 0.0
    %825 = vmatpush2.msra.mxu0 0.0
    %826 = vmatprep.subr.mxu0 0.0
    %827 = vmatpush2.msra.mxu0 0.0
    %828 = vmatprep.subr.mxu0 0.0
    %829 = vmatpush2.msra.mxu0 0.0
    %830 = vmatprep.subr.mxu0 0.0
    %831 = vmatpush2.msra.mxu0 0.0
    %832 = vmatprep.subr.mxu0 0.0
    %833 = vmatpush2.msra.mxu0 0.0
    %834 = vmatprep.subr.mxu0 0.0
    %835 = vmatpush2.msra.mxu0 0.0
    %836 = vmatprep.subr.mxu0 0.0
    %837 = vmatpush2.msra.mxu0 0.0
    %838 = vmatprep.subr.mxu0 0.0
    %839 = vmatpush2.msra.mxu0 0.0
    %840 = vmatprep.subr.mxu0 0.0
    %841 = vmatpush2.msra.mxu0 0.0
    %842 = vmatprep.subr.mxu0 0.0
    %843 = vmatpush2.msra.mxu0 0.0
    %844 = vmatprep.subr.mxu0 0.0
    %845 = vmatpush2.msra.mxu0 0.0
    %846 = vmatprep.mubr.f32.mxu0 0.0
    %847 = vmatmul.mubr.f32.gmra.mxu0 %v777
    %v848 = vpop.f32.mrf.mxu0
    %v849 = vadd.f32 0.0, %v848
    %v850 = vpop.f32.mrf.mxu0
    %851 = vmatprep.mubr.f32.mxu0 0.0
    %852 = vmatmul.mubr.f32.gmra.mxu0 %v780
    %v853 = vpop.f32.mrf.mxu0
    %v854 = vadd.f32 0.0, %v853
    %v855 = vpop.f32.mrf.mxu0
    %856 = vdwg.mxu0
    %v857 = vadd.f32 %v773, %v849
    %v858 = vadd.f32 %v774, %v854
    %v859 = vld [vmem:[%s3] sm:$0x1]
    %v861 = vlaneseq
    %v862 = vshrl.u32 %v861, 7
    %v863 = vsub.s32 0, %v862
    %v864 = vrot.slane %v859, %v863
    %v866 = vadd.f32 %v857, %v864
    %v867 = vadd.f32 %v858, %v864
    %868 = vst.msk [vmem:[#allocation2] sm:$0xff] %vm27, %v866
    %869 = vst.msk [vmem:[#allocation2 + $0x8] sm:$0xff] %vm27, %v867
    // Predicated region
    $region22: #{multi_head_attention.1} parent=1 // pred_check
      _
    $region23: #{multi_head_attention.1} parent=1 // pred_check_branch
      %871 = sbr.rel (0) target = $region25
    $region24: #{multi_head_attention.1} parent=1 // pred_region
      %s873 = ssub.s32 256, 256
      %874 = vsyncadd [#allocation3], %s873
      %s875 = sshll.u32 [#allocation2], 4
      %s876 = int_to_ptr.vmem [resolvable:$true] %s875
      %881 = dma.vmem_to_hbm [thread:$0]  %s876, 256, %s5, [#allocation3], 128, 128, 8
    $region25: #{multi_head_attention.1} parent=1 // pred_fallthru
      _
    // Predicated region
    $region26: #{multi_head_attention.1} parent=1 // pred_check
      _
    $region27: #{multi_head_attention.1} parent=1 // pred_check_branch
      %883 = sbr.rel (0) target = $region29
    $region28: #{multi_head_attention.1} parent=1 // pred_region
      %884 = dma.done [#allocation3], 256
    $region29: #{multi_head_attention.1} parent=1 // pred_fallthru
      _
    %885 = vsyncpa [#allocation3], 1

</llo_original>
